<compile_context>
chip_gen: v6e
topology: v6e:2x2x1
jax: 0.10.0
libtpu: 0.0.40
codegen_flags: <defaults>
</compile_context>

<pallas_src>
import functools

import jax
import jax.numpy as jnp
from jax.experimental import pallas as pl
from jax.experimental.pallas import tpu as pltpu


# ---- packed parameter slab layout, f32 (120, 128) ---------------------------
# rows   0: 64  col  0      -> W1^T (64, 1)   | rows   0: 64  col  1  -> b1 (64, 1)
# rows  64: 96  cols 0:64   -> W2^T (32, 64)  | rows  64: 96  col 64  -> b2 (32, 1)
# rows  96:112  cols 0:32   -> W3^T (16, 32)  | rows  96:112  col 32  -> b3 (16, 1)
# rows 112:120  cols 0:16   -> W4^T padded to (8, 16) (rows 4:8 zero)
#                            | rows 112:120  col 16  -> b4 padded to (8, 1)
SLAB_SHAPE = (120, 128)


def make_mlp_kernel(use_bf16_tanh):
    if use_bf16_tanh:
        # EUP runs bf16 transcendentals ~2x faster on v6e/v7x; cast back to
        # f32 so the MXU matmuls stay in f32 (accuracy tradeoff is only the
        # bf16 rounding of the tanh outputs).
        def act(v):
            return jnp.tanh(v.astype(jnp.bfloat16)).astype(jnp.float32)
    else:
        def act(v):
            return jnp.tanh(v)

    def mlp_kernel(x_ref, p_ref, o_ref):
        # x_ref: (1, tm) -- batch on lanes.  p_ref: packed params.  o_ref: (8, tm).
        x = x_ref[...]
        # Layer 1: Linear(1, 64) + tanh.  K=1 -> outer product on the VPU.
        w1 = p_ref[0:64, 0:1]                      # (64, 1)
        b1 = p_ref[0:64, 1:2]                      # (64, 1)
        h = act(w1 * x + b1)                       # (64, tm)
        # Layer 2: Linear(64, 32) + tanh (MXU, output lane dim = tm).
        w2 = p_ref[64:96, 0:64]                    # (32, 64)
        b2 = p_ref[64:96, 64:65]                   # (32, 1)
        h = act(jnp.dot(w2, h, preferred_element_type=jnp.float32) + b2)
        # Layer 3: Linear(32, 16) + tanh.
        w3 = p_ref[96:112, 0:32]                   # (16, 32)
        b3 = p_ref[96:112, 32:33]                  # (16, 1)
        h = act(jnp.dot(w3, h, preferred_element_type=jnp.float32) + b3)
        # Layer 4: Linear(16, 4) padded to 8 output rows -> full-sublane store.
        w4 = p_ref[112:120, 0:16]                  # (8, 16), rows 4:8 zero
        b4 = p_ref[112:120, 16:17]                 # (8, 1),  rows 4:8 zero
        o_ref[...] = (jnp.dot(w4, h, preferred_element_type=jnp.float32)
                      + b4).astype(o_ref.dtype)

    return mlp_kernel


def pack_params(params):
    """Pack the 4 (W, b) pairs (W stored as (in, out)) into one (120,128) slab."""
    (w1, b1), (w2, b2), (w3, b3), (w4, b4) = params
    f32 = jnp.float32
    slab = jnp.zeros(SLAB_SHAPE, f32)
    slab = slab.at[0:64, 0:1].set(w1.T.astype(f32))
    slab = slab.at[0:64, 1:2].set(b1.reshape(64, 1).astype(f32))
    slab = slab.at[64:96, 0:64].set(w2.T.astype(f32))
    slab = slab.at[64:96, 64:65].set(b2.reshape(32, 1).astype(f32))
    slab = slab.at[96:112, 0:32].set(w3.T.astype(f32))
    slab = slab.at[96:112, 32:33].set(b3.reshape(16, 1).astype(f32))
    w4t = jnp.zeros((8, 16), f32).at[0:4, :].set(w4.T.astype(f32))
    b4p = jnp.zeros((8, 1), f32).at[0:4, :].set(b4.reshape(4, 1).astype(f32))
    slab = slab.at[112:120, 0:16].set(w4t)
    slab = slab.at[112:120, 16:17].set(b4p)
    return slab


def _cdiv(a, b):
    return -(-a // b)


def _round_up(a, b):
    return _cdiv(a, b) * b


def _choose_tiling(n, tm_max):
    """Lane tile tm and step count: even #steps >= 2 (both v7x TCs busy),
    tm <= tm_max, tm sized relative to n so padding waste stays bounded."""
    n_lane = _round_up(max(n, 1), 128)
    steps = max(2, _cdiv(n_lane, tm_max))
    if steps % 2:
        steps += 1
    tm = _round_up(_cdiv(n_lane, steps), 128)
    return tm, steps


def pinn_inverse_forward_fm(x, param_slab, *, tm_max=8192, use_bf16_tanh=False):
    """Feature-major forward: x (N, 1) or (N,) f32 -> (4, N) f32 = seq(x).T.

    Keep this layout for downstream PDE-residual / loss kernels (4-wide last
    dims are maximally lane-sparse for any consumer)."""
    x = jnp.asarray(x, jnp.float32)
    n = x.shape[0]
    tm, steps = _choose_tiling(n, tm_max)
    n_pad = tm * steps
    xt = jnp.pad(x.reshape(1, n), ((0, 0), (0, n_pad - n)))       # (1, n_pad)

    slab_bytes = 4 * SLAB_SHAPE[0] * SLAB_SHAPE[1]
    cost = pl.CostEstimate(
        flops=5824 * n_pad,              # 128 + 4128 + 1040 + 264 + biases / point
        transcendentals=112 * n_pad,     # 64 + 32 + 16 tanh / point
        bytes_accessed=4 * n_pad + 32 * n_pad + slab_bytes,
    )

    out_t = pl.pallas_call(
        make_mlp_kernel(use_bf16_tanh),
        out_shape=jax.ShapeDtypeStruct((8, n_pad), jnp.float32),
        grid_spec=pltpu.PrefetchScalarGridSpec(
            num_scalar_prefetch=0,
            grid=(steps,),
            in_specs=[
                pl.BlockSpec((1, tm), lambda i: (0, i)),      # x tile, lane-dense
                pl.BlockSpec(SLAB_SHAPE, lambda i: (0, 0)),   # resident param slab
            ],
            out_specs=pl.BlockSpec((8, tm), lambda i: (0, i)),  # full-sublane store
        ),
        compiler_params=pltpu.CompilerParams(
            dimension_semantics=("parallel",),
            vmem_limit_bytes=32 * 1024 * 1024),
        cost_estimate=cost,
    )(xt, param_slab)

    return out_t[:4, :n]                                          # (4, N)


def pinn_inverse_forward(x, param_slab, **kw):
    """Module-parity forward: (N, 1) -> (N, 4), matching PyTorch seq(inp)."""
    return pinn_inverse_forward_fm(x, param_slab, **kw).T


def pinn_inverse_forward_multi(xs, param_slab, **kw):
    """Fuse several point sets (IC points, data times, PDE collocation points)
    into ONE pallas_call, then split the (4, sum N_i) output -- amortizes the
    kernel launch, param-slab DMA and grid prologue across point sets."""
    xs = [jnp.asarray(x, jnp.float32).reshape(-1, 1) for x in xs]
    sizes = [x.shape[0] for x in xs]
    out = pinn_inverse_forward_fm(jnp.concatenate(xs, axis=0), param_slab, **kw)
    outs, off = [], 0
    for s in sizes:
        outs.append(out[:, off:off + s])
        off += s
    return outs


def init_params(key):
    """Deterministic init mimicking nn.Linear default U[-1/sqrt(fan_in), +1/sqrt(fan_in)].
    Weights stored as (in, out), biases as (1, out)."""
    dims = [(1, 64), (64, 32), (32, 16), (16, 4)]
    params = []
    for (fan_in, fan_out) in dims:
        key, kw_, kb = jax.random.split(key, 3)
        bound = 1.0 / (fan_in ** 0.5)
        w = jax.random.uniform(kw_, (fan_in, fan_out), jnp.float32, -bound, bound)
        b = jax.random.uniform(kb, (1, fan_out), jnp.float32, -bound, bound)
        params.append((w, b))
    return params


def reference_forward(x, params):
    h = jnp.asarray(x, jnp.float32)
    for idx, (w, b) in enumerate(params):
        h = h @ w + b
        if idx < len(params) - 1:
            h = jnp.tanh(h)
    return h


if __name__ == "__main__":
    key = jax.random.PRNGKey(0)
    key, kx1, kx2, kx3 = jax.random.split(key, 4)
    params = init_params(key)
    slab = pack_params(params)

    # Collocation/time points: input is (N, 1) as in the PyTorch module.
    # N=173 exercises the non-multiple-of-128 tail; N=96 the sub-tile path.
    cases = ((256, kx1), (173, kx2), (96, kx3))
    for N, kx in cases:
        t = jax.random.uniform(kx, (N, 1), jnp.float32)
        ref = reference_forward(t, params)

        out = jax.block_until_ready(pinn_inverse_forward(t, slab))
        assert out.shape == (N, 4)
        assert jnp.allclose(out, ref, atol=1e-5, rtol=1e-5), "f32 mismatch vs reference"

        out_fm = jax.block_until_ready(pinn_inverse_forward_fm(t, slab))
        assert out_fm.shape == (4, N)
        assert jnp.allclose(out_fm.T, ref, atol=1e-5, rtol=1e-5), "feature-major mismatch"

    # bf16-tanh fast path (v6e/v7x accuracy tradeoff): loose tolerance check.
    t = jax.random.uniform(kx1, (256, 1), jnp.float32)
    out_bf16 = jax.block_until_ready(
        pinn_inverse_forward(t, slab, use_bf16_tanh=True))
    assert out_bf16.shape == (256, 4)
    assert jnp.allclose(out_bf16, reference_forward(t, params),
                        atol=5e-2, rtol=5e-2), "bf16-tanh path diverged"

    # Fused multi point-set call (IC point + data times + collocation points).
    t_ic = jnp.zeros((1, 1), jnp.float32)
    t_data = jax.random.uniform(kx2, (64, 1), jnp.float32)
    t_pde = jax.random.uniform(kx3, (200, 1), jnp.float32)
    o_ic, o_data, o_pde = pinn_inverse_forward_multi([t_ic, t_data, t_pde], slab)
    jax.block_until_ready(o_pde)
    assert o_ic.shape == (4, 1) and o_data.shape == (4, 64) and o_pde.shape == (4, 200)
    assert jnp.allclose(o_data.T, reference_forward(t_data, params),
                        atol=1e-5, rtol=1e-5), "fused multi-call mismatch"

    print("KERNEL_OK")
</pallas_src>

<mosaic_0001>
module attributes {stable_mosaic.version = 11 : i64} {
  func.func @mlp_kernel(%arg0: i32, %arg1: memref<1x128xf32, #tpu.memory_space<vmem>>, %arg2: memref<120x128xf32, #tpu.memory_space<vmem>>, %arg3: memref<8x128xf32, #tpu.memory_space<vmem>>) attributes {dimension_semantics = [#tpu.dimension_semantics<parallel>], iteration_bounds = array<i64: 2>, scalar_prefetch = 0 : i64, scratch_operands = 0 : i64, tpu.core_type = #tpu.core_type<tc>, window_params = [{transform_indices = @transform_0, window_bounds = array<i64: 1, 128>}, {pipeline_mode = #tpu.pipeline_mode<synchronous>, transform_indices = @transform_1, window_bounds = array<i64: 120, 128>}, {transform_indices = @transform_2, window_bounds = array<i64: 8, 128>}]} {
    %c0 = arith.constant 0 : index
    %c0_0 = arith.constant 0 : index
    %0 = vector.load %arg1[%c0, %c0_0] : memref<1x128xf32, #tpu.memory_space<vmem>>, vector<1x128xf32>
    %c0_1 = arith.constant 0 : index
    %c0_2 = arith.constant 0 : index
    %1 = vector.load %arg2[%c0_1, %c0_2] : memref<120x128xf32, #tpu.memory_space<vmem>>, vector<64x1xf32>
    %c0_3 = arith.constant 0 : index
    %c1 = arith.constant 1 : index
    %2 = vector.load %arg2[%c0_3, %c1] : memref<120x128xf32, #tpu.memory_space<vmem>>, vector<64x1xf32>
    %3 = vector.broadcast %1 : vector<64x1xf32> to vector<64x128xf32>
    %4 = vector.broadcast %0 : vector<1x128xf32> to vector<64x128xf32>
    %5 = arith.mulf %3, %4 : vector<64x128xf32>
    %6 = vector.broadcast %2 : vector<64x1xf32> to vector<64x128xf32>
    %7 = arith.addf %5, %6 : vector<64x128xf32>
    %8 = math.tanh %7 : vector<64x128xf32>
    %c64 = arith.constant 64 : index
    %c0_4 = arith.constant 0 : index
    %9 = vector.load %arg2[%c64, %c0_4] : memref<120x128xf32, #tpu.memory_space<vmem>>, vector<32x64xf32>
    %c64_5 = arith.constant 64 : index
    %c64_6 = arith.constant 64 : index
    %10 = vector.load %arg2[%c64_5, %c64_6] : memref<120x128xf32, #tpu.memory_space<vmem>>, vector<32x1xf32>
    %cst = arith.constant dense<0.000000e+00> : vector<32x128xf32>
    %11 = tpu.matmul %9, %8, %cst {dimension_numbers = #tpu.dot_dimension_numbers<[1], [0], [0], [1], [0, 0, 1, 1], [], []>} : vector<32x64xf32>, vector<64x128xf32>, vector<32x128xf32> -> vector<32x128xf32>
    %12 = vector.broadcast %10 : vector<32x1xf32> to vector<32x128xf32>
    %13 = arith.addf %11, %12 : vector<32x128xf32>
    %14 = math.tanh %13 : vector<32x128xf32>
    %c96 = arith.constant 96 : index
    %c0_7 = arith.constant 0 : index
    %15 = vector.load %arg2[%c96, %c0_7] : memref<120x128xf32, #tpu.memory_space<vmem>>, vector<16x32xf32>
    %c96_8 = arith.constant 96 : index
    %c32 = arith.constant 32 : index
    %16 = vector.load %arg2[%c96_8, %c32] : memref<120x128xf32, #tpu.memory_space<vmem>>, vector<16x1xf32>
    %cst_9 = arith.constant dense<0.000000e+00> : vector<16x128xf32>
    %17 = tpu.matmul %15, %14, %cst_9 {dimension_numbers = #tpu.dot_dimension_numbers<[1], [0], [0], [1], [0, 0, 1, 1], [], []>} : vector<16x32xf32>, vector<32x128xf32>, vector<16x128xf32> -> vector<16x128xf32>
    %18 = vector.broadcast %16 : vector<16x1xf32> to vector<16x128xf32>
    %19 = arith.addf %17, %18 : vector<16x128xf32>
    %20 = math.tanh %19 : vector<16x128xf32>
    %c112 = arith.constant 112 : index
    %c0_10 = arith.constant 0 : index
    %21 = vector.load %arg2[%c112, %c0_10] : memref<120x128xf32, #tpu.memory_space<vmem>>, vector<8x16xf32>
    %c112_11 = arith.constant 112 : index
    %c16 = arith.constant 16 : index
    %22 = vector.load %arg2[%c112_11, %c16] : memref<120x128xf32, #tpu.memory_space<vmem>>, vector<8x1xf32>
    %cst_12 = arith.constant dense<0.000000e+00> : vector<8x128xf32>
    %23 = tpu.matmul %21, %20, %cst_12 {dimension_numbers = #tpu.dot_dimension_numbers<[1], [0], [0], [1], [0, 0, 1, 1], [], []>} : vector<8x16xf32>, vector<16x128xf32>, vector<8x128xf32> -> vector<8x128xf32>
    %24 = vector.broadcast %22 : vector<8x1xf32> to vector<8x128xf32>
    %25 = arith.addf %23, %24 : vector<8x128xf32>
    %c0_13 = arith.constant 0 : index
    %c0_14 = arith.constant 0 : index
    %26 = vector.load %arg3[%c0_13, %c0_14] : memref<8x128xf32, #tpu.memory_space<vmem>>, vector<8x128xf32>
    tpu.vector_store %arg3[%c0_13, %c0_14], %25 {strides = array<i32>} : memref<8x128xf32, #tpu.memory_space<vmem>>, vector<8x128xf32>,
    return
  }
  func.func @transform_0(%arg0: i32) -> (i32, i32) {
    %c0_i32 = arith.constant 0 : i32
    %c0_i32_0 = arith.constant 0 : i32
    return %c0_i32, %arg0 : i32, i32
  }
  func.func @transform_1(%arg0: i32) -> (i32, i32) {
    %c0_i32 = arith.constant 0 : i32
    %c0_i32_0 = arith.constant 0 : i32
    %c0_i32_1 = arith.constant 0 : i32
    return %c0_i32, %c0_i32_0 : i32, i32
  }
  func.func @transform_2(%arg0: i32) -> (i32, i32) {
    %c0_i32 = arith.constant 0 : i32
    %c0_i32_0 = arith.constant 0 : i32
    return %c0_i32, %arg0 : i32, i32
  }
}

</mosaic_0001>

<llo_original>
// kernel: tpu_custom_call.1
$region0: #{tpu_custom_call.1}
  #allocation0 [shape = 'u32[]', space=smem, size = 0x4, offset = 0x4, fixed_abs, tag = 'smem constant byte address 0x4 - core index']
  #allocation1 [shape = 'u32[144,128]{1,0:T(1,128)}', space=vmem, size = 0x12000, scoped, tag = 'internal scratch']
  %s0 = inlined_call_operand.hbm [shape: f32[1,256], index: 0, kind: input, shape index: {}]
  %s1 = inlined_call_operand.hbm [shape: f32[120,128], index: 1, kind: input, shape index: {}]
  %s2 = inlined_call_operand.hbm [shape: f32[8,256], index: 2, kind: output, shape index: {}]
  %s3 = sld [smem:[#allocation0]]
  $region49: #{tpu_custom_call.1} parent=0
    _
  %s5 = ssub.s32 1, %s3
  %s6 = scalar_select 0, %s5, %s3
  $region1: #{tpu_custom_call.1} parent=0
    #allocation2 [shape = 'u8[1024]{0}', space=vmem, size = 0x400, scoped, tag = 'input window, operand 0']
    #allocation3 [shape = 's32[2]{0}', space=sflag, size = 0x8, scoped, tag = 'scoped memory for tpu_custom_call.1']
    #allocation4 [shape = 's32[2]{0}', space=sflag, size = 0x8, scoped, tag = 'scoped memory for tpu_custom_call.1']
    #allocation5 [shape = 'u8[61440]{0}', space=vmem, size = 0xf000, scoped, tag = 'input window, operand 1, single buffered']
    #allocation6 [shape = 's32[1]{0}', space=sflag, size = 0x4, scoped, tag = 'scoped memory for tpu_custom_call.1']
    #allocation7 [shape = 'u8[8192]{0}', space=vmem, size = 0x2000, scoped, tag = 'output window, operand 0']
    %7 = vsyncpa [#allocation3], 0
    %s8 = scalar_lea.sflag [#allocation3], 1
    %9 = vsyncpa %s8, 0
    %10 = vsyncpa [#allocation6], 0
    %11 = vsyncpa [#allocation4], 0
    %s12 = scalar_lea.sflag [#allocation4], 1
    %13 = vsyncpa %s12, 0
    loop: start=0, step=1, limit=4
    $region2: #{tpu_custom_call.1} parent=1 // loop_pre_header
      _
    $region3: #{tpu_custom_call.1} parent=1 // loop_header
      %s15 = sphi 0, %s19
      %p16 = scmp.ge.s32.totalorder %s15, 4
      %s25 = sphi 0, %s27
      %s28 = sphi 0, %s25
      %s29 = sphi 0, %s28
      %s45 = sphi 0, %s29
      %s49 = sphi 0, %s49
      %s51 = sphi 0, %s49
      %s52 = sphi 0, %s51
      %s66 = sphi 0, %s52
      %s72 = sphi 0, %s74
      %s75 = sphi 0, %s72
      %s76 = sphi 0, %s75
      %s92 = sphi 0, %s76
    $region4: #{tpu_custom_call.1} parent=1 // loop_header_branch
      %18 = sbr.rel (%p16) target = $region8
    $region5: #{tpu_custom_call.1} parent=1 // loop_body
      %s20 = ssub.s32 %s15, 1
      %s21 = ssub.s32 %s15, 2
      %s22 = sadd.s32 %s15, 1
      %s23 = ssub.s32 %s15, %s22
      %p24 = scmp.eq.s32.totalorder %s23, 0
      %s26 = sadd.s32 %s25, 1
      %s27 = scalar_select %p24, %s25, %s26
      %p30 = pneg %p24
      %p31 = scmp.eq.s32.totalorder %s15, 1
      %p32 = por %p30, %p31
      %p33 = scmp.ne.s32.totalorder %s25, %s28
      %p34 = scmp.eq.s32.totalorder %s15, 0
      %p35 = por %p33, %p34
      %p36 = scmp.ne.s32.totalorder %s25, %s28
      %p37 = scmp.eq.s32.totalorder %s20, 1
      %p38 = por %p36, %p37
      %p39 = scmp.ne.s32.totalorder %s28, %s29
      %p40 = scmp.eq.s32.totalorder %s20, 0
      %p41 = por %p39, %p40
      %p42 = scmp.ne.s32.totalorder %s28, %s29
      %p43 = scmp.eq.s32.totalorder %s21, 1
      %p44 = por %p42, %p43
      %p46 = scmp.ne.s32.totalorder %s29, %s45
      %p47 = scmp.eq.s32.totalorder %s21, 0
      %p48 = por %p46, %p47
      %s50 = sadd.s32 %s49, 1
      %p53 = scmp.eq.s32.totalorder %s15, 1
      %p54 = scmp.ne.s32.totalorder %s49, %s51
      %p55 = scmp.eq.s32.totalorder %s15, 0
      %p56 = por %p54, %p55
      %p57 = scmp.ne.s32.totalorder %s49, %s51
      %p58 = scmp.eq.s32.totalorder %s20, 1
      %p59 = por %p57, %p58
      %p60 = scmp.ne.s32.totalorder %s51, %s52
      %p61 = scmp.eq.s32.totalorder %s20, 0
      %p62 = por %p60, %p61
      %p63 = scmp.ne.s32.totalorder %s51, %s52
      %p64 = scmp.eq.s32.totalorder %s21, 1
      %p65 = por %p63, %p64
      %p67 = scmp.ne.s32.totalorder %s52, %s66
      %p68 = scmp.eq.s32.totalorder %s21, 0
      %p69 = por %p67, %p68
      %s70 = ssub.s32 %s15, %s22
      %p71 = scmp.eq.s32.totalorder %s70, 0
      %s73 = sadd.s32 %s72, 1
      %s74 = scalar_select %p71, %s72, %s73
      %p77 = pneg %p71
      %p78 = scmp.eq.s32.totalorder %s15, 1
      %p79 = por %p77, %p78
      %p80 = scmp.ne.s32.totalorder %s72, %s75
      %p81 = scmp.eq.s32.totalorder %s15, 0
      %p82 = por %p80, %p81
      %p83 = scmp.ne.s32.totalorder %s72, %s75
      %p84 = scmp.eq.s32.totalorder %s20, 1
      %p85 = por %p83, %p84
      %p86 = scmp.ne.s32.totalorder %s75, %s76
      %p87 = scmp.eq.s32.totalorder %s20, 0
      %p88 = por %p86, %p87
      %p89 = scmp.ne.s32.totalorder %s75, %s76
      %p90 = scmp.eq.s32.totalorder %s21, 1
      %p91 = por %p89, %p90
      %p93 = scmp.ne.s32.totalorder %s76, %s92
      %p94 = scmp.eq.s32.totalorder %s21, 0
      %p95 = por %p93, %p94
      %p96 = scmp.le.s32.totalorder 1, %s15
      %p97 = scmp.lt.s32.totalorder %s15, 3
      %p98 = pnand %p96, %p97
      %p99 = pneg %p98
      // Predicated region
      $region9: #{tpu_custom_call.1} parent=5 // pred_check
        _
      $region10: #{tpu_custom_call.1} parent=5 // pred_check_branch
        %101 = sbr.rel (%p98) target = $region12
      $region11: #{tpu_custom_call.1} parent=5 // pred_region
        %s102 = ssub.s32 %s15, 1
        // Predicated region
        $region13: #{tpu_custom_call.1} parent=11 // pred_check
          %p103 = pneg %p62
        $region14: #{tpu_custom_call.1} parent=11 // pred_check_branch
          %105 = sbr.rel (%p103) target = $region16
        $region15: #{tpu_custom_call.1} parent=11 // pred_region
          %s107 = ssub.s32 1920, 1920
          %108 = vsyncadd [#allocation6], %s107
          %s109 = sshll.u32 [#allocation5], 4
          %s110 = int_to_ptr.vmem [resolvable:$true] %s109
          %115 = dma.hbm_to_vmem [thread:$0]  %s1, 1920, %s110, [#allocation6], 128, 128, 8
        $region16: #{tpu_custom_call.1} parent=11 // pred_fallthru
          _
      $region12: #{tpu_custom_call.1} parent=5 // pred_fallthru
        _
      %p116 = scmp.lt.s32.totalorder %s15, 2
      // Predicated region
      $region17: #{tpu_custom_call.1} parent=5 // pred_check
        %p117 = pneg %p116
      $region18: #{tpu_custom_call.1} parent=5 // pred_check_branch
        %119 = sbr.rel (%p117) target = $region20
      $region19: #{tpu_custom_call.1} parent=5 // pred_region
        // Predicated region
        $region21: #{tpu_custom_call.1} parent=19 // pred_check
          %p120 = pneg %p35
        $region22: #{tpu_custom_call.1} parent=19 // pred_check_branch
          %122 = sbr.rel (%p120) target = $region24
        $region23: #{tpu_custom_call.1} parent=19 // pred_region
          %s123 = sand.u32 %s25, 1
          %s124 = scalar_lea.sflag [#allocation3], %s123
          %s125 = sand.u32 %s25, 1
          %s126 = scalar_lea.vmem [#allocation2], %s125
          %s128 = ssub.s32 16, 16
          %129 = vsyncadd %s124, %s128
          %s130 = smul.addr %s15, 16
          %s131 = scalar_lea.hbm %s0, %s130
          %s133 = sshll.u32 %s126, 4
          %s134 = int_to_ptr.vmem [resolvable:$true] %s133
          %136 = dma.hbm_to_vmem [thread:$0]  %s131, 16, %s134, %s124
        $region24: #{tpu_custom_call.1} parent=19 // pred_fallthru
          _
      $region20: #{tpu_custom_call.1} parent=5 // pred_fallthru
        _
      %p137 = scmp.le.s32.totalorder 1, %s15
      %p138 = scmp.lt.s32.totalorder %s15, 3
      %p139 = pnand %p137, %p138
      %p140 = pneg %p139
      // Predicated region
      $region25: #{tpu_custom_call.1} parent=5 // pred_check
        _
      $region26: #{tpu_custom_call.1} parent=5 // pred_check_branch
        %142 = sbr.rel (%p139) target = $region28
      $region27: #{tpu_custom_call.1} parent=5 // pred_region
        %s143 = ssub.s32 %s15, 1
        %s144 = sand.u32 %s28, 1
        %s145 = scalar_lea.sflag [#allocation3], %s144
        %s146 = sand.u32 %s28, 1
        %s147 = scalar_lea.vmem [#allocation2], %s146
        // Predicated region
        $region29: #{tpu_custom_call.1} parent=27 // pred_check
          %p148 = pneg %p41
        $region30: #{tpu_custom_call.1} parent=27 // pred_check_branch
          %150 = sbr.rel (%p148) target = $region32
        $region31: #{tpu_custom_call.1} parent=27 // pred_region
          %151 = dma.done %s145, 16
        $region32: #{tpu_custom_call.1} parent=27 // pred_fallthru
          _
        // Predicated region
        $region33: #{tpu_custom_call.1} parent=27 // pred_check
          %p152 = pneg %p62
        $region34: #{tpu_custom_call.1} parent=27 // pred_check_branch
          %154 = sbr.rel (%p152) target = $region36
        $region35: #{tpu_custom_call.1} parent=27 // pred_region
          %155 = dma.done [#allocation6], 1920
        $region36: #{tpu_custom_call.1} parent=27 // pred_fallthru
          _
        %s156 = sand.u32 %s28, 1
        %s157 = scalar_lea.sflag [#allocation3], %s156
        %s158 = sand.u32 %s28, 1
        %s159 = scalar_lea.vmem [#allocation2], %s158
        %p160 = pneg %p41
        %p161 = pneg %p38
        %p162 = pneg %p62
        %p163 = pneg %p59
        %p164 = pneg %p88
        %p165 = pneg %p85
        %s166 = sand.u32 %s75, 1
        %s167 = scalar_lea.sflag [#allocation4], %s166
        %s168 = sand.u32 %s75, 1
        %s169 = smul.addr %s168, 8
        %s170 = scalar_lea.vmem [#allocation7], %s169
        %v171 = vld [vmem:[%s147] sm:$0x1]
        %v172 = vld [vmem:[#allocation5] sm:$0xff]
        %v173 = vld [vmem:[#allocation5 + $0x8] sm:$0xff]
        %v174 = vld [vmem:[#allocation5 + $0x10] sm:$0xff]
        %v175 = vld [vmem:[#allocation5 + $0x18] sm:$0xff]
        %v176 = vld [vmem:[#allocation5 + $0x20] sm:$0xff]
        %v177 = vld [vmem:[#allocation5 + $0x28] sm:$0xff]
        %v178 = vld [vmem:[#allocation5 + $0x30] sm:$0xff]
        %v179 = vld [vmem:[#allocation5 + $0x38] sm:$0xff]
        %181 = vset.pattern.permute.xlu0 0
        %182 = vperm.xlu0 %181, %v172
        %v183 = vpop.permute.xlu0 %182
        %186 = vset.pattern.permute.xlu0 0
        %187 = vperm.xlu0 %186, %v173
        %v188 = vpop.permute.xlu0 %187
        %191 = vset.pattern.permute.xlu0 0
        %192 = vperm.xlu0 %191, %v174
        %v193 = vpop.permute.xlu0 %192
        %196 = vset.pattern.permute.xlu0 0
        %197 = vperm.xlu0 %196, %v175
        %v198 = vpop.permute.xlu0 %197
        %201 = vset.pattern.permute.xlu0 0
        %202 = vperm.xlu0 %201, %v176
        %v203 = vpop.permute.xlu0 %202
        %206 = vset.pattern.permute.xlu0 0
        %207 = vperm.xlu0 %206, %v177
        %v208 = vpop.permute.xlu0 %207
        %211 = vset.pattern.permute.xlu0 0
        %212 = vperm.xlu0 %211, %v178
        %v213 = vpop.permute.xlu0 %212
        %216 = vset.pattern.permute.xlu0 0
        %217 = vperm.xlu0 %216, %v179
        %v218 = vpop.permute.xlu0 %217
        %v221 = vlaneseq
        %v222 = vshrl.u32 %v221, 7
        %v223 = vsub.s32 0, %v222
        %v224 = vrot.slane %v171, %v223
        %v226 = vmul.f32 %v183, %v224
        %v227 = vmul.f32 %v188, %v224
        %v228 = vmul.f32 %v193, %v224
        %v229 = vmul.f32 %v198, %v224
        %v230 = vmul.f32 %v203, %v224
        %v231 = vmul.f32 %v208, %v224
        %v232 = vmul.f32 %v213, %v224
        %v233 = vmul.f32 %v218, %v224
        %234 = vset.pattern.permute.xlu0 1
        %235 = vperm.xlu0 %234, %v172
        %v236 = vpop.permute.xlu0 %235
        %238 = vset.pattern.permute.xlu0 1
        %239 = vperm.xlu0 %238, %v173
        %v240 = vpop.permute.xlu0 %239
        %242 = vset.pattern.permute.xlu0 1
        %243 = vperm.xlu0 %242, %v174
        %v244 = vpop.permute.xlu0 %243
        %246 = vset.pattern.permute.xlu0 1
        %247 = vperm.xlu0 %246, %v175
        %v248 = vpop.permute.xlu0 %247
        %250 = vset.pattern.permute.xlu0 1
        %251 = vperm.xlu0 %250, %v176
        %v252 = vpop.permute.xlu0 %251
        %254 = vset.pattern.permute.xlu0 1
        %255 = vperm.xlu0 %254, %v177
        %v256 = vpop.permute.xlu0 %255
        %258 = vset.pattern.permute.xlu0 1
        %259 = vperm.xlu0 %258, %v178
        %v260 = vpop.permute.xlu0 %259
        %262 = vset.pattern.permute.xlu0 1
        %263 = vperm.xlu0 %262, %v179
        %v264 = vpop.permute.xlu0 %263
        %v266 = vadd.f32 %v226, %v236
        %v267 = vadd.f32 %v227, %v240
        %v268 = vadd.f32 %v228, %v244
        %v269 = vadd.f32 %v229, %v248
        %v270 = vadd.f32 %v230, %v252
        %v271 = vadd.f32 %v231, %v256
        %v272 = vadd.f32 %v232, %v260
        %v273 = vadd.f32 %v233, %v264
        %v274 = vtanh.pop %v266
        %v275 = vtanh.pop %v267
        %v276 = vtanh.pop %v268
        %v277 = vtanh.pop %v269
        %v278 = vtanh.pop %v270
        %v279 = vtanh.pop %v271
        %v280 = vtanh.pop %v272
        %v281 = vtanh.pop %v273
        %v282 = vld [vmem:[#allocation5 + $0x40] sm:$0xff]
        %v283 = vld [vmem:[#allocation5 + $0x48] sm:$0xff]
        %v284 = vld [vmem:[#allocation5 + $0x50] sm:$0xff]
        %v285 = vld [vmem:[#allocation5 + $0x58] sm:$0xff]
        %287 = vset.pattern.permute.xlu0 64
        %288 = vperm.xlu0 %287, %v282
        %v289 = vpop.permute.xlu0 %288
        %292 = vset.pattern.permute.xlu0 64
        %293 = vperm.xlu0 %292, %v283
        %v294 = vpop.permute.xlu0 %293
        %297 = vset.pattern.permute.xlu0 64
        %298 = vperm.xlu0 %297, %v284
        %v299 = vpop.permute.xlu0 %298
        %302 = vset.pattern.permute.xlu0 64
        %303 = vperm.xlu0 %302, %v285
        %v304 = vpop.permute.xlu0 %303
        %vm306 = vcmask 523264
        %v307 = vsel %vm306, %v282, 0
        %v309 = vsel %vm306, %v283, 0
        %v311 = vsel %vm306, %v284, 0
        %v313 = vsel %vm306, %v285, 0
        %315 = vmatprep.subr.mxu0 0.0
        %316 = vmatpush1.msra.mxu0 0.0
        %317 = vmatprep.subr.mxu0 0.0
        %318 = vmatpush1.msra.mxu0 0.0
        %319 = vmatprep.subr.mxu0 0.0
        %320 = vmatpush1.msra.mxu0 0.0
        %321 = vmatprep.subr.mxu0 0.0
        %322 = vmatpush1.msra.mxu0 0.0
        %323 = vmatprep.subr.mxu0 0.0
        %324 = vmatpush1.msra.mxu0 0.0
        %325 = vmatprep.subr.mxu0 0.0
        %326 = vmatpush1.msra.mxu0 0.0
        %327 = vmatprep.subr.mxu0 0.0
        %328 = vmatpush1.msra.mxu0 0.0
        %329 = vmatprep.subr.mxu0 0.0
        %330 = vmatpush1.msra.mxu0 0.0
        %331 = vmatprep.subr.mxu0 0.0
        %332 = vmatpush1.msra.mxu0 %v281
        %333 = vmatprep.subr.mxu0 0.0
        %334 = vmatpush1.msra.mxu0 %v280
        %335 = vmatprep.subr.mxu0 0.0
        %336 = vmatpush1.msra.mxu0 %v279
        %337 = vmatprep.subr.mxu0 0.0
        %338 = vmatpush1.msra.mxu0 %v278
        %339 = vmatprep.subr.mxu0 0.0
        %340 = vmatpush1.msra.mxu0 %v277
        %341 = vmatprep.subr.mxu0 0.0
        %342 = vmatpush1.msra.mxu0 %v276
        %343 = vmatprep.subr.mxu0 0.0
        %344 = vmatpush1.msra.mxu0 %v275
        %345 = vmatprep.subr.mxu0 0.0
        %346 = vmatpush1.msra.mxu0 %v274
        %347 = vmatprep.subr.mxu0 0.0
        %348 = vmatpush2.msra.mxu0 0.0
        %349 = vmatprep.subr.mxu0 0.0
        %350 = vmatpush2.msra.mxu0 0.0
        %351 = vmatprep.subr.mxu0 0.0
        %352 = vmatpush2.msra.mxu0 0.0
        %353 = vmatprep.subr.mxu0 0.0
        %354 = vmatpush2.msra.mxu0 0.0
        %355 = vmatprep.subr.mxu0 0.0
        %356 = vmatpush2.msra.mxu0 0.0
        %357 = vmatprep.subr.mxu0 0.0
        %358 = vmatpush2.msra.mxu0 0.0
        %359 = vmatprep.subr.mxu0 0.0
        %360 = vmatpush2.msra.mxu0 0.0
        %361 = vmatprep.subr.mxu0 0.0
        %362 = vmatpush2.msra.mxu0 0.0
        %363 = vmatprep.subr.mxu0 0.0
        %364 = vmatpush2.msra.mxu0 0.0
        %365 = vmatprep.subr.mxu0 0.0
        %366 = vmatpush2.msra.mxu0 0.0
        %367 = vmatprep.subr.mxu0 0.0
        %368 = vmatpush2.msra.mxu0 0.0
        %369 = vmatprep.subr.mxu0 0.0
        %370 = vmatpush2.msra.mxu0 0.0
        %371 = vmatprep.subr.mxu0 0.0
        %372 = vmatpush2.msra.mxu0 0.0
        %373 = vmatprep.subr.mxu0 0.0
        %374 = vmatpush2.msra.mxu0 0.0
        %375 = vmatprep.subr.mxu0 0.0
        %376 = vmatpush2.msra.mxu0 0.0
        %377 = vmatprep.subr.mxu0 0.0
        %378 = vmatpush2.msra.mxu0 0.0
        %379 = vmatprep.mubr.f32.mxu0 0.0
        %380 = vmatmul.mubr.f32.gmra.mxu0 %v307
        %v381 = vpop.f32.mrf.mxu0
        %v382 = vadd.f32 %v289, %v381
        %v383 = vpop.f32.mrf.mxu0
        %384 = vmatprep.mubr.f32.mxu0 0.0
        %385 = vmatmul.mubr.f32.gmra.mxu0 %v309
        %v386 = vpop.f32.mrf.mxu0
        %v387 = vadd.f32 %v294, %v386
        %v388 = vpop.f32.mrf.mxu0
        %389 = vmatprep.mubr.f32.mxu0 0.0
        %390 = vmatmul.mubr.f32.gmra.mxu0 %v311
        %v391 = vpop.f32.mrf.mxu0
        %v392 = vadd.f32 %v299, %v391
        %v393 = vpop.f32.mrf.mxu0
        %394 = vmatprep.mubr.f32.mxu0 0.0
        %395 = vmatmul.mubr.f32.gmra.mxu0 %v313
        %v396 = vpop.f32.mrf.mxu0
        %v397 = vadd.f32 %v304, %v396
        %v398 = vpop.f32.mrf.mxu0
        %399 = vdwg.mxu0
        %v400 = vtanh.pop %v382
        %v401 = vtanh.pop %v387
        %v402 = vtanh.pop %v392
        %v403 = vtanh.pop %v397
        %v404 = vld [vmem:[#allocation5 + $0x60] sm:$0xff]
        %v405 = vld [vmem:[#allocation5 + $0x68] sm:$0xff]
        %407 = vset.pattern.permute.xlu0 32
        %408 = vperm.xlu0 %407, %v404
        %v409 = vpop.permute.xlu0 %408
        %412 = vset.pattern.permute.xlu0 32
        %413 = vperm.xlu0 %412, %v405
        %v414 = vpop.permute.xlu0 %413
        %vm416 = vcmask 261120
        %v417 = vsel %vm416, %v404, 0
        %v419 = vsel %vm416, %v405, 0
        %421 = vmatprep.subr.mxu0 0.0
        %422 = vmatpush1.msra.mxu0 0.0
        %423 = vmatprep.subr.mxu0 0.0
        %424 = vmatpush1.msra.mxu0 0.0
        %425 = vmatprep.subr.mxu0 0.0
        %426 = vmatpush1.msra.mxu0 0.0
        %427 = vmatprep.subr.mxu0 0.0
        %428 = vmatpush1.msra.mxu0 0.0
        %429 = vmatprep.subr.mxu0 0.0
        %430 = vmatpush1.msra.mxu0 0.0
        %431 = vmatprep.subr.mxu0 0.0
        %432 = vmatpush1.msra.mxu0 0.0
        %433 = vmatprep.subr.mxu0 0.0
        %434 = vmatpush1.msra.mxu0 0.0
        %435 = vmatprep.subr.mxu0 0.0
        %436 = vmatpush1.msra.mxu0 0.0
        %437 = vmatprep.subr.mxu0 0.0
        %438 = vmatpush1.msra.mxu0 0.0
        %439 = vmatprep.subr.mxu0 0.0
        %440 = vmatpush1.msra.mxu0 0.0
        %441 = vmatprep.subr.mxu0 0.0
        %442 = vmatpush1.msra.mxu0 0.0
        %443 = vmatprep.subr.mxu0 0.0
        %444 = vmatpush1.msra.mxu0 0.0
        %445 = vmatprep.subr.mxu0 0.0
        %446 = vmatpush1.msra.mxu0 %v403
        %447 = vmatprep.subr.mxu0 0.0
        %448 = vmatpush1.msra.mxu0 %v402
        %449 = vmatprep.subr.mxu0 0.0
        %450 = vmatpush1.msra.mxu0 %v401
        %451 = vmatprep.subr.mxu0 0.0
        %452 = vmatpush1.msra.mxu0 %v400
        %453 = vmatprep.subr.mxu0 0.0
        %454 = vmatpush2.msra.mxu0 0.0
        %455 = vmatprep.subr.mxu0 0.0
        %456 = vmatpush2.msra.mxu0 0.0
        %457 = vmatprep.subr.mxu0 0.0
        %458 = vmatpush2.msra.mxu0 0.0
        %459 = vmatprep.subr.mxu0 0.0
        %460 = vmatpush2.msra.mxu0 0.0
        %461 = vmatprep.subr.mxu0 0.0
        %462 = vmatpush2.msra.mxu0 0.0
        %463 = vmatprep.subr.mxu0 0.0
        %464 = vmatpush2.msra.mxu0 0.0
        %465 = vmatprep.subr.mxu0 0.0
        %466 = vmatpush2.msra.mxu0 0.0
        %467 = vmatprep.subr.mxu0 0.0
        %468 = vmatpush2.msra.mxu0 0.0
        %469 = vmatprep.subr.mxu0 0.0
        %470 = vmatpush2.msra.mxu0 0.0
        %471 = vmatprep.subr.mxu0 0.0
        %472 = vmatpush2.msra.mxu0 0.0
        %473 = vmatprep.subr.mxu0 0.0
        %474 = vmatpush2.msra.mxu0 0.0
        %475 = vmatprep.subr.mxu0 0.0
        %476 = vmatpush2.msra.mxu0 0.0
        %477 = vmatprep.subr.mxu0 0.0
        %478 = vmatpush2.msra.mxu0 0.0
        %479 = vmatprep.subr.mxu0 0.0
        %480 = vmatpush2.msra.mxu0 0.0
        %481 = vmatprep.subr.mxu0 0.0
        %482 = vmatpush2.msra.mxu0 0.0
        %483 = vmatprep.subr.mxu0 0.0
        %484 = vmatpush2.msra.mxu0 0.0
        %485 = vmatprep.mubr.f32.mxu0 0.0
        %486 = vmatmul.mubr.f32.gmra.mxu0 %v417
        %v487 = vpop.f32.mrf.mxu0
        %v488 = vadd.f32 %v409, %v487
        %v489 = vpop.f32.mrf.mxu0
        %490 = vmatprep.mubr.f32.mxu0 0.0
        %491 = vmatmul.mubr.f32.gmra.mxu0 %v419
        %v492 = vpop.f32.mrf.mxu0
        %v493 = vadd.f32 %v414, %v492
        %v494 = vpop.f32.mrf.mxu0
        %495 = vdwg.mxu0
        %v496 = vtanh.pop %v488
        %v497 = vtanh.pop %v493
        %v498 = vld [vmem:[#allocation5 + $0x70] sm:$0xff]
        %500 = vset.pattern.permute.xlu0 16
        %501 = vperm.xlu0 %500, %v498
        %v502 = vpop.permute.xlu0 %501
        %vm504 = vcmask 130048
        %v505 = vsel %vm504, %v498, 0
        %507 = vmatprep.subr.mxu0 0.0
        %508 = vmatpush1.msra.mxu0 0.0
        %509 = vmatprep.subr.mxu0 0.0
        %510 = vmatpush1.msra.mxu0 0.0
        %511 = vmatprep.subr.mxu0 0.0
        %512 = vmatpush1.msra.mxu0 0.0
        %513 = vmatprep.subr.mxu0 0.0
        %514 = vmatpush1.msra.mxu0 0.0
        %515 = vmatprep.subr.mxu0 0.0
        %516 = vmatpush1.msra.mxu0 0.0
        %517 = vmatprep.subr.mxu0 0.0
        %518 = vmatpush1.msra.mxu0 0.0
        %519 = vmatprep.subr.mxu0 0.0
        %520 = vmatpush1.msra.mxu0 0.0
        %521 = vmatprep.subr.mxu0 0.0
        %522 = vmatpush1.msra.mxu0 0.0
        %523 = vmatprep.subr.mxu0 0.0
        %524 = vmatpush1.msra.mxu0 0.0
        %525 = vmatprep.subr.mxu0 0.0
        %526 = vmatpush1.msra.mxu0 0.0
        %527 = vmatprep.subr.mxu0 0.0
        %528 = vmatpush1.msra.mxu0 0.0
        %529 = vmatprep.subr.mxu0 0.0
        %530 = vmatpush1.msra.mxu0 0.0
        %531 = vmatprep.subr.mxu0 0.0
        %532 = vmatpush1.msra.mxu0 0.0
        %533 = vmatprep.subr.mxu0 0.0
        %534 = vmatpush1.msra.mxu0 0.0
        %535 = vmatprep.subr.mxu0 0.0
        %536 = vmatpush1.msra.mxu0 %v497
        %537 = vmatprep.subr.mxu0 0.0
        %538 = vmatpush1.msra.mxu0 %v496
        %539 = vmatprep.subr.mxu0 0.0
        %540 = vmatpush2.msra.mxu0 0.0
        %541 = vmatprep.subr.mxu0 0.0
        %542 = vmatpush2.msra.mxu0 0.0
        %543 = vmatprep.subr.mxu0 0.0
        %544 = vmatpush2.msra.mxu0 0.0
        %545 = vmatprep.subr.mxu0 0.0
        %546 = vmatpush2.msra.mxu0 0.0
        %547 = vmatprep.subr.mxu0 0.0
        %548 = vmatpush2.msra.mxu0 0.0
        %549 = vmatprep.subr.mxu0 0.0
        %550 = vmatpush2.msra.mxu0 0.0
        %551 = vmatprep.subr.mxu0 0.0
        %552 = vmatpush2.msra.mxu0 0.0
        %553 = vmatprep.subr.mxu0 0.0
        %554 = vmatpush2.msra.mxu0 0.0
        %555 = vmatprep.subr.mxu0 0.0
        %556 = vmatpush2.msra.mxu0 0.0
        %557 = vmatprep.subr.mxu0 0.0
        %558 = vmatpush2.msra.mxu0 0.0
        %559 = vmatprep.subr.mxu0 0.0
        %560 = vmatpush2.msra.mxu0 0.0
        %561 = vmatprep.subr.mxu0 0.0
        %562 = vmatpush2.msra.mxu0 0.0
        %563 = vmatprep.subr.mxu0 0.0
        %564 = vmatpush2.msra.mxu0 0.0
        %565 = vmatprep.subr.mxu0 0.0
        %566 = vmatpush2.msra.mxu0 0.0
        %567 = vmatprep.subr.mxu0 0.0
        %568 = vmatpush2.msra.mxu0 0.0
        %569 = vmatprep.subr.mxu0 0.0
        %570 = vmatpush2.msra.mxu0 0.0
        %571 = vmatprep.mubr.f32.mxu0 0.0
        %572 = vmatmul.mubr.f32.gmra.mxu0 %v505
        %v573 = vpop.f32.mrf.mxu0
        %v574 = vadd.f32 %v502, %v573
        %v575 = vpop.f32.mrf.mxu0
        %576 = vdwg.mxu0
        %577 = vst [vmem:[%s170] sm:$0xff] %v574
        %s578 = sand.u32 %s75, 1
        %s579 = scalar_lea.sflag [#allocation4], %s578
        %s580 = sand.u32 %s75, 1
        %s581 = smul.addr %s580, 8
        %s582 = scalar_lea.vmem [#allocation7], %s581
        // Predicated region
        $region37: #{tpu_custom_call.1} parent=27 // pred_check
          %p583 = pneg %p85
        $region38: #{tpu_custom_call.1} parent=27 // pred_check_branch
          %585 = sbr.rel (%p583) target = $region40
        $region39: #{tpu_custom_call.1} parent=27 // pred_region
          %s587 = ssub.s32 128, 128
          %588 = vsyncadd %s579, %s587
          %s589 = smul.addr %s20, 128
          %s590 = scalar_lea.hbm %s2, %s589
          %s592 = sshll.u32 %s582, 4
          %s593 = int_to_ptr.vmem [resolvable:$true] %s592
          %595 = dma.vmem_to_hbm [thread:$0]  %s593, 128, %s590, %s579
        $region40: #{tpu_custom_call.1} parent=27 // pred_fallthru
          _
      $region28: #{tpu_custom_call.1} parent=5 // pred_fallthru
        _
      %p596 = scmp.le.s32.totalorder 2, %s15
      // Predicated region
      $region41: #{tpu_custom_call.1} parent=5 // pred_check
        %p597 = pneg %p596
      $region42: #{tpu_custom_call.1} parent=5 // pred_check_branch
        %599 = sbr.rel (%p597) target = $region44
      $region43: #{tpu_custom_call.1} parent=5 // pred_region
        %s600 = ssub.s32 %s15, 2
        // Predicated region
        $region45: #{tpu_custom_call.1} parent=43 // pred_check
          %p601 = pneg %p91
        $region46: #{tpu_custom_call.1} parent=43 // pred_check_branch
          %603 = sbr.rel (%p601) target = $region48
        $region47: #{tpu_custom_call.1} parent=43 // pred_region
          %s604 = sand.u32 %s76, 1
          %s605 = scalar_lea.sflag [#allocation4], %s604
          %s606 = sand.u32 %s76, 1
          %s607 = smul.addr %s606, 8
          %s608 = scalar_lea.vmem [#allocation7], %s607
          %609 = dma.done %s605, 128
        $region48: #{tpu_custom_call.1} parent=43 // pred_fallthru
          _
      $region44: #{tpu_custom_call.1} parent=5 // pred_fallthru
        _
    $region6: #{tpu_custom_call.1} parent=1 // loop_footer
      %s19 = sadd.s32 1, %s15
    $region7: #{tpu_custom_call.1} parent=1 // loop_footer_branch
      %14 = sbr.rel target = $region3
    $region8: #{tpu_custom_call.1} parent=1 // loop_exit
      _
    %610 = vsyncpa [#allocation3], 1
    %s611 = scalar_lea.sflag [#allocation3], 1
    %612 = vsyncpa %s611, 1
    %613 = vsyncpa [#allocation6], 1
    %614 = vsyncpa [#allocation4], 1
    %s615 = scalar_lea.sflag [#allocation4], 1
    %616 = vsyncpa %s615, 1

</llo_original>
